<compile_context>
chip_gen: v5e
topology: v5e:2x2
jax: 0.10.0
libtpu: 0.0.40
codegen_flags: <defaults>
</compile_context>

<pallas_src>
import jax
import jax.numpy as jnp
from jax.experimental import pallas as pl
from jax.experimental.pallas import tpu as pltpu

FEAT_DIM = 2048          # model_dict['resnet50'] -> dim_in = 2048
NUM_CLASSES = 10
PAD_CLASSES = 128        # lane-dense (multiple-of-128) padded class dim
EPS = 1e-12              # torch.nn.functional.normalize default eps


def proto_head_kernel(x_ref, proto_ref, logits_ref, feat_ref):
    # x_ref:      [TB, FEAT_DIM]           f32 encoder features (batch tile)
    # proto_ref:  [FEAT_DIM, PAD_CLASSES]  f32 prototypes (transposed, zero-padded)
    # logits_ref: [TB, PAD_CLASSES]        f32 (cols >= NUM_CLASSES are zero)
    # feat_ref:   [TB, FEAT_DIM]           f32 L2-normalized features
    x = x_ref[...]
    ssq = jnp.sum(x * x, axis=-1, keepdims=True)            # [TB, 1]
    # 1 / max(||x||, eps) == rsqrt(max(ssq, eps^2)); rsqrt runs on the EUP slot.
    inv = jax.lax.rsqrt(jnp.maximum(ssq, EPS * EPS))
    xn = x * inv
    feat_ref[...] = xn.astype(feat_ref.dtype)
    # MXU matmul, f32 operands + f32 accumulation (matches PyTorch numerics);
    # lane-dense [TB, 128] result store.
    logits = jnp.dot(xn, proto_ref[...], preferred_element_type=jnp.float32)
    logits_ref[...] = logits.astype(logits_ref.dtype)


def pad_proto(proto):
    """[NUM_CLASSES, FEAT_DIM] f32 -> lane-dense resident operand
    [FEAT_DIM, PAD_CLASSES] f32 (transposed, zero-padded).

    For inference with frozen weights, call once and cache the result."""
    c, f = proto.shape
    assert c == NUM_CLASSES and f == FEAT_DIM
    padded = jnp.zeros((FEAT_DIM, PAD_CLASSES), jnp.float32)
    return padded.at[:, :NUM_CLASSES].set(proto.T.astype(jnp.float32))


def learnable_proto_head(features, proto_pad, *, tb=1024,
                         vmem_limit_bytes=48 << 20):
    """features:  [B, 2048] f32 encoder output
       proto_pad: [2048, 128] f32 from pad_proto()
       returns (logits [B, NUM_CLASSES] f32, feature_norm [B, 2048] f32)."""
    B, F = features.shape
    assert F == FEAT_DIM
    assert proto_pad.shape == (FEAT_DIM, PAD_CLASSES)

    # --- batch tiling: always pad (never fall back to a single giant block) ---
    b8 = ((B + 7) // 8) * 8                  # batch rounded up to sublane multiple
    tb = max(8, min(tb, b8))
    tb = (tb // 8) * 8                       # block rows must be a multiple of 8
    # Guarantee >= 2 grid steps when possible so ("parallel",) can shard the
    # batch tiles across both v7x TensorCores.
    if tb == b8 and b8 >= 16 and (b8 // 2) % 8 == 0:
        tb = b8 // 2
    grid_len = pl.cdiv(b8, tb)
    b_pad = grid_len * tb                    # padded batch: grid tiles evenly

    x = features
    if b_pad != B:
        x = jnp.pad(features, ((0, b_pad - B), (0, 0)))

    logits_pad, feat_norm = pl.pallas_call(
        proto_head_kernel,
        out_shape=(
            jax.ShapeDtypeStruct((b_pad, PAD_CLASSES), jnp.float32),
            jax.ShapeDtypeStruct((b_pad, FEAT_DIM), jnp.float32),
        ),
        grid_spec=pltpu.PrefetchScalarGridSpec(
            num_scalar_prefetch=0,
            grid=(grid_len,),
            in_specs=[
                # x: new batch tile every grid step (double-buffered DMA)
                pl.BlockSpec((tb, FEAT_DIM), lambda i: (i, 0)),
                # prototypes: constant block index -> fetched once, stays resident
                pl.BlockSpec((FEAT_DIM, PAD_CLASSES), lambda i: (0, 0)),
            ],
            out_specs=[
                pl.BlockSpec((tb, PAD_CLASSES), lambda i: (i, 0)),
                pl.BlockSpec((tb, FEAT_DIM), lambda i: (i, 0)),
            ],
        ),
        compiler_params=pltpu.CompilerParams(
            dimension_semantics=("parallel",),
            vmem_limit_bytes=vmem_limit_bytes,
        ),
    )(x, proto_pad)
    return logits_pad[:B, :NUM_CLASSES], feat_norm[:B, :]


if __name__ == "__main__":
    key = jax.random.PRNGKey(0)
    kx, kp = jax.random.split(key)
    # B=30 exercises the batch-padding path (30 -> 32) and a 2-step grid.
    B = 30
    features = jax.random.normal(kx, (B, FEAT_DIM), jnp.float32)
    # learnable_proto init in the module is torch.randn(num_classes, dim_in)
    proto = jax.random.normal(kp, (NUM_CLASSES, FEAT_DIM), jnp.float32)

    # Hoisted prototype preparation (cacheable for frozen/inference weights).
    proto_pad = pad_proto(proto)

    logits, feat_norm = learnable_proto_head(features, proto_pad)
    logits = jax.block_until_ready(logits)
    feat_norm = jax.block_until_ready(feat_norm)

    # Pure-JAX reference of the head.
    ref_norm = features / jnp.maximum(
        jnp.sqrt(jnp.sum(features * features, axis=1, keepdims=True)), EPS)
    ref_logits = ref_norm @ proto.T

    assert logits.shape == (B, NUM_CLASSES)
    assert feat_norm.shape == (B, FEAT_DIM)
    assert jnp.allclose(feat_norm, ref_norm, atol=1e-5, rtol=1e-5)
    assert jnp.allclose(logits, ref_logits, atol=1e-3, rtol=1e-3)
    print("KERNEL_OK")
</pallas_src>

<mosaic_0001>
module attributes {stable_mosaic.version = 11 : i64} {
  func.func @proto_head_kernel(%arg0: i32, %arg1: memref<16x2048xf32, #tpu.memory_space<vmem>>, %arg2: memref<2048x128xf32, #tpu.memory_space<vmem>>, %arg3: memref<16x128xf32, #tpu.memory_space<vmem>>, %arg4: memref<16x2048xf32, #tpu.memory_space<vmem>>) attributes {dimension_semantics = [#tpu.dimension_semantics<parallel>], iteration_bounds = array<i64: 2>, scalar_prefetch = 0 : i64, scratch_operands = 0 : i64, tpu.core_type = #tpu.core_type<tc>, window_params = [{transform_indices = @transform_0, window_bounds = array<i64: 16, 2048>}, {pipeline_mode = #tpu.pipeline_mode<synchronous>, transform_indices = @transform_1, window_bounds = array<i64: 2048, 128>}, {transform_indices = @transform_2, window_bounds = array<i64: 16, 128>}, {transform_indices = @transform_3, window_bounds = array<i64: 16, 2048>}]} {
    %c0 = arith.constant 0 : index
    %c0_0 = arith.constant 0 : index
    %0 = vector.load %arg1[%c0, %c0_0] : memref<16x2048xf32, #tpu.memory_space<vmem>>, vector<16x2048xf32>
    %1 = arith.mulf %0, %0 : vector<16x2048xf32>
    %cst = arith.constant dense<0.000000e+00> : vector<16xf32>
    %2 = vector.multi_reduction <add>, %1, %cst [1] : vector<16x2048xf32> to vector<16xf32>
    %3 = vector.shape_cast %2 : vector<16xf32> to vector<16x1xf32>
    %cst_1 = arith.constant 1.000000e-24 : f32
    %4 = vector.broadcast %cst_1 : f32 to vector<16x1xf32>
    %5 = arith.maximumf %3, %4 : vector<16x1xf32>
    %6 = math.rsqrt %5 : vector<16x1xf32>
    %7 = vector.broadcast %6 : vector<16x1xf32> to vector<16x2048xf32>
    %8 = arith.mulf %0, %7 : vector<16x2048xf32>
    %c0_2 = arith.constant 0 : index
    %c0_3 = arith.constant 0 : index
    %9 = vector.load %arg4[%c0_2, %c0_3] : memref<16x2048xf32, #tpu.memory_space<vmem>>, vector<16x2048xf32>
    tpu.vector_store %arg4[%c0_2, %c0_3], %8 {strides = array<i32>} : memref<16x2048xf32, #tpu.memory_space<vmem>>, vector<16x2048xf32>,
    %c0_4 = arith.constant 0 : index
    %c0_5 = arith.constant 0 : index
    %10 = vector.load %arg2[%c0_4, %c0_5] : memref<2048x128xf32, #tpu.memory_space<vmem>>, vector<2048x128xf32>
    %cst_6 = arith.constant dense<0.000000e+00> : vector<16x128xf32>
    %11 = tpu.matmul %8, %10, %cst_6 {dimension_numbers = #tpu.dot_dimension_numbers<[1], [0], [0], [1], [0, 0, 1, 1], [], []>} : vector<16x2048xf32>, vector<2048x128xf32>, vector<16x128xf32> -> vector<16x128xf32>
    %c0_7 = arith.constant 0 : index
    %c0_8 = arith.constant 0 : index
    %12 = vector.load %arg3[%c0_7, %c0_8] : memref<16x128xf32, #tpu.memory_space<vmem>>, vector<16x128xf32>
    tpu.vector_store %arg3[%c0_7, %c0_8], %11 {strides = array<i32>} : memref<16x128xf32, #tpu.memory_space<vmem>>, vector<16x128xf32>,
    return
  }
  func.func @transform_0(%arg0: i32) -> (i32, i32) {
    %c0_i32 = arith.constant 0 : i32
    %c0_i32_0 = arith.constant 0 : i32
    return %arg0, %c0_i32 : i32, i32
  }
  func.func @transform_1(%arg0: i32) -> (i32, i32) {
    %c0_i32 = arith.constant 0 : i32
    %c0_i32_0 = arith.constant 0 : i32
    %c0_i32_1 = arith.constant 0 : i32
    return %c0_i32, %c0_i32_0 : i32, i32
  }
  func.func @transform_2(%arg0: i32) -> (i32, i32) {
    %c0_i32 = arith.constant 0 : i32
    %c0_i32_0 = arith.constant 0 : i32
    return %arg0, %c0_i32 : i32, i32
  }
  func.func @transform_3(%arg0: i32) -> (i32, i32) {
    %c0_i32 = arith.constant 0 : i32
    %c0_i32_0 = arith.constant 0 : i32
    return %arg0, %c0_i32 : i32, i32
  }
}

</mosaic_0001>

<llo_original>
// kernel: tpu_custom_call.1
$region0: #{tpu_custom_call.1}
  #allocation0 [shape = 'u32[]', space=smem, size = 0x4, offset = 0x4, fixed_abs, tag = 'smem constant byte address 0x4 - core index']
  #allocation1 [shape = 'u32[72,128]{1,0:T(1,128)}', space=vmem, size = 0x9000, scoped, tag = 'internal scratch']
  %s0 = inlined_call_operand.hbm [shape: f32[32,2048], index: 0, kind: input, shape index: {}]
  %s1 = inlined_call_operand.hbm [shape: f32[2048,128], index: 1, kind: input, shape index: {}]
  %s2 = inlined_call_operand.hbm [shape: f32[32,128], index: 2, kind: output, shape index: {0}]
  %s3 = inlined_call_operand.hbm [shape: f32[32,2048], index: 3, kind: output, shape index: {1}]
  %4 = xla_tuple %s2, %s3
  %s5 = sld [smem:[#allocation0]]
  $region57: #{tpu_custom_call.1} parent=0
    _
  %s7 = ssub.s32 1, %s5
  %s8 = scalar_select 0, %s7, %s5
  $region1: #{tpu_custom_call.1} parent=0
    #allocation2 [shape = 'u8[262144]{0}', space=vmem, size = 0x40000, scoped, tag = 'input window, operand 0']
    #allocation3 [shape = 's32[2]{0}', space=sflag, size = 0x8, scoped, tag = 'scoped memory for tpu_custom_call.1']
    #allocation4 [shape = 's32[2]{0}', space=sflag, size = 0x8, scoped, tag = 'scoped memory for tpu_custom_call.1']
    #allocation5 [shape = 'u8[1048576]{0}', space=vmem, size = 0x100000, scoped, tag = 'input window, operand 1, single buffered']
    #allocation6 [shape = 's32[1]{0}', space=sflag, size = 0x4, scoped, tag = 'scoped memory for tpu_custom_call.1']
    #allocation7 [shape = 'u8[16384]{0}', space=vmem, size = 0x4000, scoped, tag = 'output window, operand 0']
    #allocation8 [shape = 'u8[262144]{0}', space=vmem, size = 0x40000, scoped, tag = 'output window, operand 1']
    #allocation9 [shape = 's32[2]{0}', space=sflag, size = 0x8, scoped, tag = 'scoped memory for tpu_custom_call.1']
    %9 = vsyncpa [#allocation3], 0
    %s10 = scalar_lea.sflag [#allocation3], 1
    %11 = vsyncpa %s10, 0
    %12 = vsyncpa [#allocation6], 0
    %13 = vsyncpa [#allocation4], 0
    %s14 = scalar_lea.sflag [#allocation4], 1
    %15 = vsyncpa %s14, 0
    %16 = vsyncpa [#allocation9], 0
    %s17 = scalar_lea.sflag [#allocation9], 1
    %18 = vsyncpa %s17, 0
    loop: start=0, step=1, limit=4
    $region2: #{tpu_custom_call.1} parent=1 // loop_pre_header
      _
    $region3: #{tpu_custom_call.1} parent=1 // loop_header
      %s20 = sphi 0, %s24
      %p21 = scmp.ge.s32.totalorder %s20, 4
      %s30 = sphi 0, %s32
      %s33 = sphi 0, %s30
      %s34 = sphi 0, %s33
      %s50 = sphi 0, %s34
      %s54 = sphi 0, %s54
      %s56 = sphi 0, %s54
      %s57 = sphi 0, %s56
      %s71 = sphi 0, %s57
      %s77 = sphi 0, %s79
      %s80 = sphi 0, %s77
      %s81 = sphi 0, %s80
      %s97 = sphi 0, %s81
      %s103 = sphi 0, %s105
      %s106 = sphi 0, %s103
      %s107 = sphi 0, %s106
      %s123 = sphi 0, %s107
    $region4: #{tpu_custom_call.1} parent=1 // loop_header_branch
      %23 = sbr.rel (%p21) target = $region8
    $region5: #{tpu_custom_call.1} parent=1 // loop_body
      %s25 = ssub.s32 %s20, 1
      %s26 = ssub.s32 %s20, 2
      %s27 = sadd.s32 %s20, 1
      %s28 = ssub.s32 %s20, %s27
      %p29 = scmp.eq.s32.totalorder %s28, 0
      %s31 = sadd.s32 %s30, 1
      %s32 = scalar_select %p29, %s30, %s31
      %p35 = pneg %p29
      %p36 = scmp.eq.s32.totalorder %s20, 1
      %p37 = por %p35, %p36
      %p38 = scmp.ne.s32.totalorder %s30, %s33
      %p39 = scmp.eq.s32.totalorder %s20, 0
      %p40 = por %p38, %p39
      %p41 = scmp.ne.s32.totalorder %s30, %s33
      %p42 = scmp.eq.s32.totalorder %s25, 1
      %p43 = por %p41, %p42
      %p44 = scmp.ne.s32.totalorder %s33, %s34
      %p45 = scmp.eq.s32.totalorder %s25, 0
      %p46 = por %p44, %p45
      %p47 = scmp.ne.s32.totalorder %s33, %s34
      %p48 = scmp.eq.s32.totalorder %s26, 1
      %p49 = por %p47, %p48
      %p51 = scmp.ne.s32.totalorder %s34, %s50
      %p52 = scmp.eq.s32.totalorder %s26, 0
      %p53 = por %p51, %p52
      %s55 = sadd.s32 %s54, 1
      %p58 = scmp.eq.s32.totalorder %s20, 1
      %p59 = scmp.ne.s32.totalorder %s54, %s56
      %p60 = scmp.eq.s32.totalorder %s20, 0
      %p61 = por %p59, %p60
      %p62 = scmp.ne.s32.totalorder %s54, %s56
      %p63 = scmp.eq.s32.totalorder %s25, 1
      %p64 = por %p62, %p63
      %p65 = scmp.ne.s32.totalorder %s56, %s57
      %p66 = scmp.eq.s32.totalorder %s25, 0
      %p67 = por %p65, %p66
      %p68 = scmp.ne.s32.totalorder %s56, %s57
      %p69 = scmp.eq.s32.totalorder %s26, 1
      %p70 = por %p68, %p69
      %p72 = scmp.ne.s32.totalorder %s57, %s71
      %p73 = scmp.eq.s32.totalorder %s26, 0
      %p74 = por %p72, %p73
      %s75 = ssub.s32 %s20, %s27
      %p76 = scmp.eq.s32.totalorder %s75, 0
      %s78 = sadd.s32 %s77, 1
      %s79 = scalar_select %p76, %s77, %s78
      %p82 = pneg %p76
      %p83 = scmp.eq.s32.totalorder %s20, 1
      %p84 = por %p82, %p83
      %p85 = scmp.ne.s32.totalorder %s77, %s80
      %p86 = scmp.eq.s32.totalorder %s20, 0
      %p87 = por %p85, %p86
      %p88 = scmp.ne.s32.totalorder %s77, %s80
      %p89 = scmp.eq.s32.totalorder %s25, 1
      %p90 = por %p88, %p89
      %p91 = scmp.ne.s32.totalorder %s80, %s81
      %p92 = scmp.eq.s32.totalorder %s25, 0
      %p93 = por %p91, %p92
      %p94 = scmp.ne.s32.totalorder %s80, %s81
      %p95 = scmp.eq.s32.totalorder %s26, 1
      %p96 = por %p94, %p95
      %p98 = scmp.ne.s32.totalorder %s81, %s97
      %p99 = scmp.eq.s32.totalorder %s26, 0
      %p100 = por %p98, %p99
      %s101 = ssub.s32 %s20, %s27
      %p102 = scmp.eq.s32.totalorder %s101, 0
      %s104 = sadd.s32 %s103, 1
      %s105 = scalar_select %p102, %s103, %s104
      %p108 = pneg %p102
      %p109 = scmp.eq.s32.totalorder %s20, 1
      %p110 = por %p108, %p109
      %p111 = scmp.ne.s32.totalorder %s103, %s106
      %p112 = scmp.eq.s32.totalorder %s20, 0
      %p113 = por %p111, %p112
      %p114 = scmp.ne.s32.totalorder %s103, %s106
      %p115 = scmp.eq.s32.totalorder %s25, 1
      %p116 = por %p114, %p115
      %p117 = scmp.ne.s32.totalorder %s106, %s107
      %p118 = scmp.eq.s32.totalorder %s25, 0
      %p119 = por %p117, %p118
      %p120 = scmp.ne.s32.totalorder %s106, %s107
      %p121 = scmp.eq.s32.totalorder %s26, 1
      %p122 = por %p120, %p121
      %p124 = scmp.ne.s32.totalorder %s107, %s123
      %p125 = scmp.eq.s32.totalorder %s26, 0
      %p126 = por %p124, %p125
      %p127 = scmp.le.s32.totalorder 1, %s20
      %p128 = scmp.lt.s32.totalorder %s20, 3
      %p129 = pnand %p127, %p128
      %p130 = pneg %p129
      // Predicated region
      $region9: #{tpu_custom_call.1} parent=5 // pred_check
        _
      $region10: #{tpu_custom_call.1} parent=5 // pred_check_branch
        %132 = sbr.rel (%p129) target = $region12
      $region11: #{tpu_custom_call.1} parent=5 // pred_region
        %s133 = ssub.s32 %s20, 1
        // Predicated region
        $region13: #{tpu_custom_call.1} parent=11 // pred_check
          %p134 = pneg %p67
        $region14: #{tpu_custom_call.1} parent=11 // pred_check_branch
          %136 = sbr.rel (%p134) target = $region16
        $region15: #{tpu_custom_call.1} parent=11 // pred_region
          %138 = vsyncadd [#allocation6], 0
          %s139 = sshll.u32 %s1, 4
          %s140 = int_to_ptr.hbm [resolvable:$true] %s139
          %s141 = sshll.u32 [#allocation5], 4
          %s142 = int_to_ptr.vmem [resolvable:$true] %s141
          %147 = dma.hbm_to_vmem [thread:$0]  %s140, 32768, %s142, [#allocation6], 128, 128, 8
        $region16: #{tpu_custom_call.1} parent=11 // pred_fallthru
          _
      $region12: #{tpu_custom_call.1} parent=5 // pred_fallthru
        _
      %p148 = scmp.lt.s32.totalorder %s20, 2
      // Predicated region
      $region17: #{tpu_custom_call.1} parent=5 // pred_check
        %p149 = pneg %p148
      $region18: #{tpu_custom_call.1} parent=5 // pred_check_branch
        %151 = sbr.rel (%p149) target = $region20
      $region19: #{tpu_custom_call.1} parent=5 // pred_region
        // Predicated region
        $region21: #{tpu_custom_call.1} parent=19 // pred_check
          %p152 = pneg %p40
        $region22: #{tpu_custom_call.1} parent=19 // pred_check_branch
          %154 = sbr.rel (%p152) target = $region24
        $region23: #{tpu_custom_call.1} parent=19 // pred_region
          %s155 = sand.u32 %s30, 1
          %s156 = scalar_lea.sflag [#allocation3], %s155
          %s157 = sand.u32 %s30, 1
          %s158 = smul.addr %s157, 256
          %s159 = scalar_lea.vmem [#allocation2], %s158
          %s160 = smul.u32 2, %s20
          %162 = vsyncadd %s156, 0
          %s163 = smul.addr %s160, 16
          %s164 = smul.addr %s163, 8
          %s165 = scalar_lea.hbm %s0, %s164
          %s166 = sshll.u32 %s165, 4
          %s167 = int_to_ptr.hbm [resolvable:$true] %s166
          %s168 = sshll.u32 %s159, 4
          %s169 = int_to_ptr.vmem [resolvable:$true] %s168
          %174 = dma.hbm_to_vmem [thread:$0]  %s167, 4096, %s169, %s156, 2048, 2048, 128
        $region24: #{tpu_custom_call.1} parent=19 // pred_fallthru
          _
      $region20: #{tpu_custom_call.1} parent=5 // pred_fallthru
        _
      %p175 = scmp.le.s32.totalorder 1, %s20
      %p176 = scmp.lt.s32.totalorder %s20, 3
      %p177 = pnand %p175, %p176
      %p178 = pneg %p177
      // Predicated region
      $region25: #{tpu_custom_call.1} parent=5 // pred_check
        _
      $region26: #{tpu_custom_call.1} parent=5 // pred_check_branch
        %180 = sbr.rel (%p177) target = $region28
      $region27: #{tpu_custom_call.1} parent=5 // pred_region
        %s181 = ssub.s32 %s20, 1
        %s182 = sand.u32 %s33, 1
        %s183 = scalar_lea.sflag [#allocation3], %s182
        %s184 = sand.u32 %s33, 1
        %s185 = smul.addr %s184, 256
        %s186 = scalar_lea.vmem [#allocation2], %s185
        // Predicated region
        $region29: #{tpu_custom_call.1} parent=27 // pred_check
          %p187 = pneg %p46
        $region30: #{tpu_custom_call.1} parent=27 // pred_check_branch
          %189 = sbr.rel (%p187) target = $region32
        $region31: #{tpu_custom_call.1} parent=27 // pred_region
          %191 = dma.done %s183, 4096
        $region32: #{tpu_custom_call.1} parent=27 // pred_fallthru
          _
        // Predicated region
        $region33: #{tpu_custom_call.1} parent=27 // pred_check
          %p192 = pneg %p67
        $region34: #{tpu_custom_call.1} parent=27 // pred_check_branch
          %194 = sbr.rel (%p192) target = $region36
        $region35: #{tpu_custom_call.1} parent=27 // pred_region
          %196 = dma.done [#allocation6], 32768
        $region36: #{tpu_custom_call.1} parent=27 // pred_fallthru
          _
        %s197 = sand.u32 %s33, 1
        %s198 = scalar_lea.sflag [#allocation3], %s197
        %s199 = sand.u32 %s33, 1
        %s200 = smul.addr %s199, 256
        %s201 = scalar_lea.vmem [#allocation2], %s200
        %p202 = pneg %p46
        %p203 = pneg %p43
        %p204 = pneg %p67
        %p205 = pneg %p64
        %p206 = pneg %p93
        %p207 = pneg %p90
        %s208 = sand.u32 %s80, 1
        %s209 = scalar_lea.sflag [#allocation4], %s208
        %s210 = sand.u32 %s80, 1
        %s211 = smul.addr %s210, 16
        %s212 = scalar_lea.vmem [#allocation7], %s211
        %p213 = pneg %p119
        %p214 = pneg %p116
        %s215 = sand.u32 %s106, 1
        %s216 = scalar_lea.sflag [#allocation9], %s215
        %s217 = sand.u32 %s106, 1
        %s218 = smul.addr %s217, 256
        %s219 = scalar_lea.vmem [#allocation8], %s218
        %s220 = smul.u32 2, %s25
        %s221 = smul.u32 2, %s25
        %s222 = smul.u32 2, %s25
        %v223 = vld [vmem:[%s186] sm:$0xff]
        %v224 = vld [vmem:[%s186 + $0x8] sm:$0xff]
        %v225 = vld [vmem:[%s186 + $0x10] sm:$0xff]
        %v226 = vld [vmem:[%s186 + $0x18] sm:$0xff]
        %v227 = vld [vmem:[%s186 + $0x20] sm:$0xff]
        %v228 = vld [vmem:[%s186 + $0x28] sm:$0xff]
        %v229 = vld [vmem:[%s186 + $0x30] sm:$0xff]
        %v230 = vld [vmem:[%s186 + $0x38] sm:$0xff]
        %v231 = vld [vmem:[%s186 + $0x40] sm:$0xff]
        %v232 = vld [vmem:[%s186 + $0x48] sm:$0xff]
        %v233 = vld [vmem:[%s186 + $0x50] sm:$0xff]
        %v234 = vld [vmem:[%s186 + $0x58] sm:$0xff]
        %v235 = vld [vmem:[%s186 + $0x60] sm:$0xff]
        %v236 = vld [vmem:[%s186 + $0x68] sm:$0xff]
        %v237 = vld [vmem:[%s186 + $0x70] sm:$0xff]
        %v238 = vld [vmem:[%s186 + $0x78] sm:$0xff]
        %v239 = vld [vmem:[%s186 + $0x80] sm:$0xff]
        %v240 = vld [vmem:[%s186 + $0x88] sm:$0xff]
        %v241 = vld [vmem:[%s186 + $0x90] sm:$0xff]
        %v242 = vld [vmem:[%s186 + $0x98] sm:$0xff]
        %v243 = vld [vmem:[%s186 + $0xa0] sm:$0xff]
        %v244 = vld [vmem:[%s186 + $0xa8] sm:$0xff]
        %v245 = vld [vmem:[%s186 + $0xb0] sm:$0xff]
        %v246 = vld [vmem:[%s186 + $0xb8] sm:$0xff]
        %v247 = vld [vmem:[%s186 + $0xc0] sm:$0xff]
        %v248 = vld [vmem:[%s186 + $0xc8] sm:$0xff]
        %v249 = vld [vmem:[%s186 + $0xd0] sm:$0xff]
        %v250 = vld [vmem:[%s186 + $0xd8] sm:$0xff]
        %v251 = vld [vmem:[%s186 + $0xe0] sm:$0xff]
        %v252 = vld [vmem:[%s186 + $0xe8] sm:$0xff]
        %v253 = vld [vmem:[%s186 + $0xf0] sm:$0xff]
        %v254 = vld [vmem:[%s186 + $0xf8] sm:$0xff]
        %v255 = vmul.f32 %v223, %v223
        %v256 = vmul.f32 %v224, %v224
        %v257 = vmul.f32 %v225, %v225
        %v258 = vmul.f32 %v226, %v226
        %v259 = vmul.f32 %v227, %v227
        %v260 = vmul.f32 %v228, %v228
        %v261 = vmul.f32 %v229, %v229
        %v262 = vmul.f32 %v230, %v230
        %v263 = vmul.f32 %v231, %v231
        %v264 = vmul.f32 %v232, %v232
        %v265 = vmul.f32 %v233, %v233
        %v266 = vmul.f32 %v234, %v234
        %v267 = vmul.f32 %v235, %v235
        %v268 = vmul.f32 %v236, %v236
        %v269 = vmul.f32 %v237, %v237
        %v270 = vmul.f32 %v238, %v238
        %v271 = vmul.f32 %v239, %v239
        %v272 = vmul.f32 %v240, %v240
        %v273 = vmul.f32 %v241, %v241
        %v274 = vmul.f32 %v242, %v242
        %v275 = vmul.f32 %v243, %v243
        %v276 = vmul.f32 %v244, %v244
        %v277 = vmul.f32 %v245, %v245
        %v278 = vmul.f32 %v246, %v246
        %v279 = vmul.f32 %v247, %v247
        %v280 = vmul.f32 %v248, %v248
        %v281 = vmul.f32 %v249, %v249
        %v282 = vmul.f32 %v250, %v250
        %v283 = vmul.f32 %v251, %v251
        %v284 = vmul.f32 %v252, %v252
        %v285 = vmul.f32 %v253, %v253
        %v286 = vmul.f32 %v254, %v254
        %v287 = vadd.f32 %v255, %v256
        %v288 = vadd.f32 %v287, %v257
        %v289 = vadd.f32 %v288, %v258
        %v290 = vadd.f32 %v289, %v259
        %v291 = vadd.f32 %v290, %v260
        %v292 = vadd.f32 %v291, %v261
        %v293 = vadd.f32 %v292, %v262
        %v294 = vadd.f32 %v293, %v263
        %v295 = vadd.f32 %v294, %v264
        %v296 = vadd.f32 %v295, %v265
        %v297 = vadd.f32 %v296, %v266
        %v298 = vadd.f32 %v297, %v267
        %v299 = vadd.f32 %v298, %v268
        %v300 = vadd.f32 %v299, %v269
        %v301 = vadd.f32 %v300, %v270
        %302 = vadd.xlane.f32.xlu0 %v301
        %v303 = vpop.xlane.xlu0 %302
        %v304 = vadd.f32 %v271, %v272
        %v305 = vadd.f32 %v304, %v273
        %v306 = vadd.f32 %v305, %v274
        %v307 = vadd.f32 %v306, %v275
        %v308 = vadd.f32 %v307, %v276
        %v309 = vadd.f32 %v308, %v277
        %v310 = vadd.f32 %v309, %v278
        %v311 = vadd.f32 %v310, %v279
        %v312 = vadd.f32 %v311, %v280
        %v313 = vadd.f32 %v312, %v281
        %v314 = vadd.f32 %v313, %v282
        %v315 = vadd.f32 %v314, %v283
        %v316 = vadd.f32 %v315, %v284
        %v317 = vadd.f32 %v316, %v285
        %v318 = vadd.f32 %v317, %v286
        %319 = vadd.xlane.f32.xlu0 %v318
        %v320 = vpop.xlane.xlu0 %319
        %v321 = vmax.f32 %v303, 1e-24
        %v322 = vmax.f32 %v320, 1e-24
        %v323 = vrsqrt.pop %v321
        %v324 = vmul.f32 %v323, %v321
        %v325 = vmul.f32 %v324, %v323
        %v326 = vmul.f32 0.5, %v325
        %v327 = vsub.f32 1.5, %v326
        %v328 = vmul.f32 %v323, %v327
        %vm329 = vweird.f32 %v321
        %vm330 = vweird.f32 %v323
        %vm331 = vmor %vm329, %vm330
        %v332 = vsel %vm331, %v323, %v328
        %v333 = vrsqrt.pop %v322
        %v334 = vmul.f32 %v333, %v322
        %v335 = vmul.f32 %v334, %v333
        %v336 = vmul.f32 0.5, %v335
        %v337 = vsub.f32 1.5, %v336
        %v338 = vmul.f32 %v333, %v337
        %vm339 = vweird.f32 %v322
        %vm340 = vweird.f32 %v333
        %vm341 = vmor %vm339, %vm340
        %v342 = vsel %vm341, %v333, %v338
        %v343 = vmul.f32 %v223, %v332
        %v344 = vmul.f32 %v224, %v332
        %v345 = vmul.f32 %v225, %v332
        %v346 = vmul.f32 %v226, %v332
        %v347 = vmul.f32 %v227, %v332
        %v348 = vmul.f32 %v228, %v332
        %v349 = vmul.f32 %v229, %v332
        %v350 = vmul.f32 %v230, %v332
        %v351 = vmul.f32 %v231, %v332
        %v352 = vmul.f32 %v232, %v332
        %v353 = vmul.f32 %v233, %v332
        %v354 = vmul.f32 %v234, %v332
        %v355 = vmul.f32 %v235, %v332
        %v356 = vmul.f32 %v236, %v332
        %v357 = vmul.f32 %v237, %v332
        %v358 = vmul.f32 %v238, %v332
        %v359 = vmul.f32 %v239, %v342
        %v360 = vmul.f32 %v240, %v342
        %v361 = vmul.f32 %v241, %v342
        %v362 = vmul.f32 %v242, %v342
        %v363 = vmul.f32 %v243, %v342
        %v364 = vmul.f32 %v244, %v342
        %v365 = vmul.f32 %v245, %v342
        %v366 = vmul.f32 %v246, %v342
        %v367 = vmul.f32 %v247, %v342
        %v368 = vmul.f32 %v248, %v342
        %v369 = vmul.f32 %v249, %v342
        %v370 = vmul.f32 %v250, %v342
        %v371 = vmul.f32 %v251, %v342
        %v372 = vmul.f32 %v252, %v342
        %v373 = vmul.f32 %v253, %v342
        %v374 = vmul.f32 %v254, %v342
        %375 = vst [vmem:[%s219] sm:$0xff] %v343
        %376 = vst [vmem:[%s219 + $0x8] sm:$0xff] %v344
        %377 = vst [vmem:[%s219 + $0x10] sm:$0xff] %v345
        %378 = vst [vmem:[%s219 + $0x18] sm:$0xff] %v346
        %379 = vst [vmem:[%s219 + $0x20] sm:$0xff] %v347
        %380 = vst [vmem:[%s219 + $0x28] sm:$0xff] %v348
        %381 = vst [vmem:[%s219 + $0x30] sm:$0xff] %v349
        %382 = vst [vmem:[%s219 + $0x38] sm:$0xff] %v350
        %383 = vst [vmem:[%s219 + $0x40] sm:$0xff] %v351
        %384 = vst [vmem:[%s219 + $0x48] sm:$0xff] %v352
        %385 = vst [vmem:[%s219 + $0x50] sm:$0xff] %v353
        %386 = vst [vmem:[%s219 + $0x58] sm:$0xff] %v354
        %387 = vst [vmem:[%s219 + $0x60] sm:$0xff] %v355
        %388 = vst [vmem:[%s219 + $0x68] sm:$0xff] %v356
        %389 = vst [vmem:[%s219 + $0x70] sm:$0xff] %v357
        %390 = vst [vmem:[%s219 + $0x78] sm:$0xff] %v358
        %391 = vst [vmem:[%s219 + $0x80] sm:$0xff] %v359
        %392 = vst [vmem:[%s219 + $0x88] sm:$0xff] %v360
        %393 = vst [vmem:[%s219 + $0x90] sm:$0xff] %v361
        %394 = vst [vmem:[%s219 + $0x98] sm:$0xff] %v362
        %395 = vst [vmem:[%s219 + $0xa0] sm:$0xff] %v363
        %396 = vst [vmem:[%s219 + $0xa8] sm:$0xff] %v364
        %397 = vst [vmem:[%s219 + $0xb0] sm:$0xff] %v365
        %398 = vst [vmem:[%s219 + $0xb8] sm:$0xff] %v366
        %399 = vst [vmem:[%s219 + $0xc0] sm:$0xff] %v367
        %400 = vst [vmem:[%s219 + $0xc8] sm:$0xff] %v368
        %401 = vst [vmem:[%s219 + $0xd0] sm:$0xff] %v369
        %402 = vst [vmem:[%s219 + $0xd8] sm:$0xff] %v370
        %403 = vst [vmem:[%s219 + $0xe0] sm:$0xff] %v371
        %404 = vst [vmem:[%s219 + $0xe8] sm:$0xff] %v372
        %405 = vst [vmem:[%s219 + $0xf0] sm:$0xff] %v373
        %406 = vst [vmem:[%s219 + $0xf8] sm:$0xff] %v374
        %v407 = vld [vmem:[#allocation5] sm:$0xff]
        %v408 = vld [vmem:[#allocation5 + $0x8] sm:$0xff]
        %v409 = vld [vmem:[#allocation5 + $0x10] sm:$0xff]
        %v410 = vld [vmem:[#allocation5 + $0x18] sm:$0xff]
        %v411 = vld [vmem:[#allocation5 + $0x20] sm:$0xff]
        %v412 = vld [vmem:[#allocation5 + $0x28] sm:$0xff]
        %v413 = vld [vmem:[#allocation5 + $0x30] sm:$0xff]
        %v414 = vld [vmem:[#allocation5 + $0x38] sm:$0xff]
        %v415 = vld [vmem:[#allocation5 + $0x40] sm:$0xff]
        %v416 = vld [vmem:[#allocation5 + $0x48] sm:$0xff]
        %v417 = vld [vmem:[#allocation5 + $0x50] sm:$0xff]
        %v418 = vld [vmem:[#allocation5 + $0x58] sm:$0xff]
        %v419 = vld [vmem:[#allocation5 + $0x60] sm:$0xff]
        %v420 = vld [vmem:[#allocation5 + $0x68] sm:$0xff]
        %v421 = vld [vmem:[#allocation5 + $0x70] sm:$0xff]
        %v422 = vld [vmem:[#allocation5 + $0x78] sm:$0xff]
        %v423 = vld [vmem:[#allocation5 + $0x80] sm:$0xff]
        %v424 = vld [vmem:[#allocation5 + $0x88] sm:$0xff]
        %v425 = vld [vmem:[#allocation5 + $0x90] sm:$0xff]
        %v426 = vld [vmem:[#allocation5 + $0x98] sm:$0xff]
        %v427 = vld [vmem:[#allocation5 + $0xa0] sm:$0xff]
        %v428 = vld [vmem:[#allocation5 + $0xa8] sm:$0xff]
        %v429 = vld [vmem:[#allocation5 + $0xb0] sm:$0xff]
        %v430 = vld [vmem:[#allocation5 + $0xb8] sm:$0xff]
        %v431 = vld [vmem:[#allocation5 + $0xc0] sm:$0xff]
        %v432 = vld [vmem:[#allocation5 + $0xc8] sm:$0xff]
        %v433 = vld [vmem:[#allocation5 + $0xd0] sm:$0xff]
        %v434 = vld [vmem:[#allocation5 + $0xd8] sm:$0xff]
        %v435 = vld [vmem:[#allocation5 + $0xe0] sm:$0xff]
        %v436 = vld [vmem:[#allocation5 + $0xe8] sm:$0xff]
        %v437 = vld [vmem:[#allocation5 + $0xf0] sm:$0xff]
        %v438 = vld [vmem:[#allocation5 + $0xf8] sm:$0xff]
        %v439 = vld [vmem:[#allocation5 + $0x100] sm:$0xff]
        %v440 = vld [vmem:[#allocation5 + $0x108] sm:$0xff]
        %v441 = vld [vmem:[#allocation5 + $0x110] sm:$0xff]
        %v442 = vld [vmem:[#allocation5 + $0x118] sm:$0xff]
        %v443 = vld [vmem:[#allocation5 + $0x120] sm:$0xff]
        %v444 = vld [vmem:[#allocation5 + $0x128] sm:$0xff]
        %v445 = vld [vmem:[#allocation5 + $0x130] sm:$0xff]
        %v446 = vld [vmem:[#allocation5 + $0x138] sm:$0xff]
        %v447 = vld [vmem:[#allocation5 + $0x140] sm:$0xff]
        %v448 = vld [vmem:[#allocation5 + $0x148] sm:$0xff]
        %v449 = vld [vmem:[#allocation5 + $0x150] sm:$0xff]
        %v450 = vld [vmem:[#allocation5 + $0x158] sm:$0xff]
        %v451 = vld [vmem:[#allocation5 + $0x160] sm:$0xff]
        %v452 = vld [vmem:[#allocation5 + $0x168] sm:$0xff]
        %v453 = vld [vmem:[#allocation5 + $0x170] sm:$0xff]
        %v454 = vld [vmem:[#allocation5 + $0x178] sm:$0xff]
        %v455 = vld [vmem:[#allocation5 + $0x180] sm:$0xff]
        %v456 = vld [vmem:[#allocation5 + $0x188] sm:$0xff]
        %v457 = vld [vmem:[#allocation5 + $0x190] sm:$0xff]
        %v458 = vld [vmem:[#allocation5 + $0x198] sm:$0xff]
        %v459 = vld [vmem:[#allocation5 + $0x1a0] sm:$0xff]
        %v460 = vld [vmem:[#allocation5 + $0x1a8] sm:$0xff]
        %v461 = vld [vmem:[#allocation5 + $0x1b0] sm:$0xff]
        %v462 = vld [vmem:[#allocation5 + $0x1b8] sm:$0xff]
        %v463 = vld [vmem:[#allocation5 + $0x1c0] sm:$0xff]
        %v464 = vld [vmem:[#allocation5 + $0x1c8] sm:$0xff]
        %v465 = vld [vmem:[#allocation5 + $0x1d0] sm:$0xff]
        %v466 = vld [vmem:[#allocation5 + $0x1d8] sm:$0xff]
        %v467 = vld [vmem:[#allocation5 + $0x1e0] sm:$0xff]
        %v468 = vld [vmem:[#allocation5 + $0x1e8] sm:$0xff]
        %v469 = vld [vmem:[#allocation5 + $0x1f0] sm:$0xff]
        %v470 = vld [vmem:[#allocation5 + $0x1f8] sm:$0xff]
        %v471 = vld [vmem:[#allocation5 + $0x200] sm:$0xff]
        %v472 = vld [vmem:[#allocation5 + $0x208] sm:$0xff]
        %v473 = vld [vmem:[#allocation5 + $0x210] sm:$0xff]
        %v474 = vld [vmem:[#allocation5 + $0x218] sm:$0xff]
        %v475 = vld [vmem:[#allocation5 + $0x220] sm:$0xff]
        %v476 = vld [vmem:[#allocation5 + $0x228] sm:$0xff]
        %v477 = vld [vmem:[#allocation5 + $0x230] sm:$0xff]
        %v478 = vld [vmem:[#allocation5 + $0x238] sm:$0xff]
        %v479 = vld [vmem:[#allocation5 + $0x240] sm:$0xff]
        %v480 = vld [vmem:[#allocation5 + $0x248] sm:$0xff]
        %v481 = vld [vmem:[#allocation5 + $0x250] sm:$0xff]
        %v482 = vld [vmem:[#allocation5 + $0x258] sm:$0xff]
        %v483 = vld [vmem:[#allocation5 + $0x260] sm:$0xff]
        %v484 = vld [vmem:[#allocation5 + $0x268] sm:$0xff]
        %v485 = vld [vmem:[#allocation5 + $0x270] sm:$0xff]
        %v486 = vld [vmem:[#allocation5 + $0x278] sm:$0xff]
        %v487 = vld [vmem:[#allocation5 + $0x280] sm:$0xff]
        %v488 = vld [vmem:[#allocation5 + $0x288] sm:$0xff]
        %v489 = vld [vmem:[#allocation5 + $0x290] sm:$0xff]
        %v490 = vld [vmem:[#allocation5 + $0x298] sm:$0xff]
        %v491 = vld [vmem:[#allocation5 + $0x2a0] sm:$0xff]
        %v492 = vld [vmem:[#allocation5 + $0x2a8] sm:$0xff]
        %v493 = vld [vmem:[#allocation5 + $0x2b0] sm:$0xff]
        %v494 = vld [vmem:[#allocation5 + $0x2b8] sm:$0xff]
        %v495 = vld [vmem:[#allocation5 + $0x2c0] sm:$0xff]
        %v496 = vld [vmem:[#allocation5 + $0x2c8] sm:$0xff]
        %v497 = vld [vmem:[#allocation5 + $0x2d0] sm:$0xff]
        %v498 = vld [vmem:[#allocation5 + $0x2d8] sm:$0xff]
        %v499 = vld [vmem:[#allocation5 + $0x2e0] sm:$0xff]
        %v500 = vld [vmem:[#allocation5 + $0x2e8] sm:$0xff]
        %v501 = vld [vmem:[#allocation5 + $0x2f0] sm:$0xff]
        %v502 = vld [vmem:[#allocation5 + $0x2f8] sm:$0xff]
        %v503 = vld [vmem:[#allocation5 + $0x300] sm:$0xff]
        %v504 = vld [vmem:[#allocation5 + $0x308] sm:$0xff]
        %v505 = vld [vmem:[#allocation5 + $0x310] sm:$0xff]
        %v506 = vld [vmem:[#allocation5 + $0x318] sm:$0xff]
        %v507 = vld [vmem:[#allocation5 + $0x320] sm:$0xff]
        %v508 = vld [vmem:[#allocation5 + $0x328] sm:$0xff]
        %v509 = vld [vmem:[#allocation5 + $0x330] sm:$0xff]
        %v510 = vld [vmem:[#allocation5 + $0x338] sm:$0xff]
        %v511 = vld [vmem:[#allocation5 + $0x340] sm:$0xff]
        %v512 = vld [vmem:[#allocation5 + $0x348] sm:$0xff]
        %v513 = vld [vmem:[#allocation5 + $0x350] sm:$0xff]
        %v514 = vld [vmem:[#allocation5 + $0x358] sm:$0xff]
        %v515 = vld [vmem:[#allocation5 + $0x360] sm:$0xff]
        %v516 = vld [vmem:[#allocation5 + $0x368] sm:$0xff]
        %v517 = vld [vmem:[#allocation5 + $0x370] sm:$0xff]
        %v518 = vld [vmem:[#allocation5 + $0x378] sm:$0xff]
        %v519 = vld [vmem:[#allocation5 + $0x380] sm:$0xff]
        %v520 = vld [vmem:[#allocation5 + $0x388] sm:$0xff]
        %v521 = vld [vmem:[#allocation5 + $0x390] sm:$0xff]
        %v522 = vld [vmem:[#allocation5 + $0x398] sm:$0xff]
        %v523 = vld [vmem:[#allocation5 + $0x3a0] sm:$0xff]
        %v524 = vld [vmem:[#allocation5 + $0x3a8] sm:$0xff]
        %v525 = vld [vmem:[#allocation5 + $0x3b0] sm:$0xff]
        %v526 = vld [vmem:[#allocation5 + $0x3b8] sm:$0xff]
        %v527 = vld [vmem:[#allocation5 + $0x3c0] sm:$0xff]
        %v528 = vld [vmem:[#allocation5 + $0x3c8] sm:$0xff]
        %v529 = vld [vmem:[#allocation5 + $0x3d0] sm:$0xff]
        %v530 = vld [vmem:[#allocation5 + $0x3d8] sm:$0xff]
        %v531 = vld [vmem:[#allocation5 + $0x3e0] sm:$0xff]
        %v532 = vld [vmem:[#allocation5 + $0x3e8] sm:$0xff]
        %v533 = vld [vmem:[#allocation5 + $0x3f0] sm:$0xff]
        %v534 = vld [vmem:[#allocation5 + $0x3f8] sm:$0xff]
        %v535 = vld [vmem:[#allocation5 + $0x400] sm:$0xff]
        %v536 = vld [vmem:[#allocation5 + $0x408] sm:$0xff]
        %v537 = vld [vmem:[#allocation5 + $0x410] sm:$0xff]
        %v538 = vld [vmem:[#allocation5 + $0x418] sm:$0xff]
        %v539 = vld [vmem:[#allocation5 + $0x420] sm:$0xff]
        %v540 = vld [vmem:[#allocation5 + $0x428] sm:$0xff]
        %v541 = vld [vmem:[#allocation5 + $0x430] sm:$0xff]
        %v542 = vld [vmem:[#allocation5 + $0x438] sm:$0xff]
        %v543 = vld [vmem:[#allocation5 + $0x440] sm:$0xff]
        %v544 = vld [vmem:[#allocation5 + $0x448] sm:$0xff]
        %v545 = vld [vmem:[#allocation5 + $0x450] sm:$0xff]
        %v546 = vld [vmem:[#allocation5 + $0x458] sm:$0xff]
        %v547 = vld [vmem:[#allocation5 + $0x460] sm:$0xff]
        %v548 = vld [vmem:[#allocation5 + $0x468] sm:$0xff]
        %v549 = vld [vmem:[#allocation5 + $0x470] sm:$0xff]
        %v550 = vld [vmem:[#allocation5 + $0x478] sm:$0xff]
        %v551 = vld [vmem:[#allocation5 + $0x480] sm:$0xff]
        %v552 = vld [vmem:[#allocation5 + $0x488] sm:$0xff]
        %v553 = vld [vmem:[#allocation5 + $0x490] sm:$0xff]
        %v554 = vld [vmem:[#allocation5 + $0x498] sm:$0xff]
        %v555 = vld [vmem:[#allocation5 + $0x4a0] sm:$0xff]
        %v556 = vld [vmem:[#allocation5 + $0x4a8] sm:$0xff]
        %v557 = vld [vmem:[#allocation5 + $0x4b0] sm:$0xff]
        %v558 = vld [vmem:[#allocation5 + $0x4b8] sm:$0xff]
        %v559 = vld [vmem:[#allocation5 + $0x4c0] sm:$0xff]
        %v560 = vld [vmem:[#allocation5 + $0x4c8] sm:$0xff]
        %v561 = vld [vmem:[#allocation5 + $0x4d0] sm:$0xff]
        %v562 = vld [vmem:[#allocation5 + $0x4d8] sm:$0xff]
        %v563 = vld [vmem:[#allocation5 + $0x4e0] sm:$0xff]
        %v564 = vld [vmem:[#allocation5 + $0x4e8] sm:$0xff]
        %v565 = vld [vmem:[#allocation5 + $0x4f0] sm:$0xff]
        %v566 = vld [vmem:[#allocation5 + $0x4f8] sm:$0xff]
        %v567 = vld [vmem:[#allocation5 + $0x500] sm:$0xff]
        %v568 = vld [vmem:[#allocation5 + $0x508] sm:$0xff]
        %v569 = vld [vmem:[#allocation5 + $0x510] sm:$0xff]
        %v570 = vld [vmem:[#allocation5 + $0x518] sm:$0xff]
        %v571 = vld [vmem:[#allocation5 + $0x520] sm:$0xff]
        %v572 = vld [vmem:[#allocation5 + $0x528] sm:$0xff]
        %v573 = vld [vmem:[#allocation5 + $0x530] sm:$0xff]
        %v574 = vld [vmem:[#allocation5 + $0x538] sm:$0xff]
        %v575 = vld [vmem:[#allocation5 + $0x540] sm:$0xff]
        %v576 = vld [vmem:[#allocation5 + $0x548] sm:$0xff]
        %v577 = vld [vmem:[#allocation5 + $0x550] sm:$0xff]
        %v578 = vld [vmem:[#allocation5 + $0x558] sm:$0xff]
        %v579 = vld [vmem:[#allocation5 + $0x560] sm:$0xff]
        %v580 = vld [vmem:[#allocation5 + $0x568] sm:$0xff]
        %v581 = vld [vmem:[#allocation5 + $0x570] sm:$0xff]
        %v582 = vld [vmem:[#allocation5 + $0x578] sm:$0xff]
        %v583 = vld [vmem:[#allocation5 + $0x580] sm:$0xff]
        %v584 = vld [vmem:[#allocation5 + $0x588] sm:$0xff]
        %v585 = vld [vmem:[#allocation5 + $0x590] sm:$0xff]
        %v586 = vld [vmem:[#allocation5 + $0x598] sm:$0xff]
        %v587 = vld [vmem:[#allocation5 + $0x5a0] sm:$0xff]
        %v588 = vld [vmem:[#allocation5 + $0x5a8] sm:$0xff]
        %v589 = vld [vmem:[#allocation5 + $0x5b0] sm:$0xff]
        %v590 = vld [vmem:[#allocation5 + $0x5b8] sm:$0xff]
        %v591 = vld [vmem:[#allocation5 + $0x5c0] sm:$0xff]
        %v592 = vld [vmem:[#allocation5 + $0x5c8] sm:$0xff]
        %v593 = vld [vmem:[#allocation5 + $0x5d0] sm:$0xff]
        %v594 = vld [vmem:[#allocation5 + $0x5d8] sm:$0xff]
        %v595 = vld [vmem:[#allocation5 + $0x5e0] sm:$0xff]
        %v596 = vld [vmem:[#allocation5 + $0x5e8] sm:$0xff]
        %v597 = vld [vmem:[#allocation5 + $0x5f0] sm:$0xff]
        %v598 = vld [vmem:[#allocation5 + $0x5f8] sm:$0xff]
        %v599 = vld [vmem:[#allocation5 + $0x600] sm:$0xff]
        %v600 = vld [vmem:[#allocation5 + $0x608] sm:$0xff]
        %v601 = vld [vmem:[#allocation5 + $0x610] sm:$0xff]
        %v602 = vld [vmem:[#allocation5 + $0x618] sm:$0xff]
        %v603 = vld [vmem:[#allocation5 + $0x620] sm:$0xff]
        %v604 = vld [vmem:[#allocation5 + $0x628] sm:$0xff]
        %v605 = vld [vmem:[#allocation5 + $0x630] sm:$0xff]
        %v606 = vld [vmem:[#allocation5 + $0x638] sm:$0xff]
        %v607 = vld [vmem:[#allocation5 + $0x640] sm:$0xff]
        %v608 = vld [vmem:[#allocation5 + $0x648] sm:$0xff]
        %v609 = vld [vmem:[#allocation5 + $0x650] sm:$0xff]
        %v610 = vld [vmem:[#allocation5 + $0x658] sm:$0xff]
        %v611 = vld [vmem:[#allocation5 + $0x660] sm:$0xff]
        %v612 = vld [vmem:[#allocation5 + $0x668] sm:$0xff]
        %v613 = vld [vmem:[#allocation5 + $0x670] sm:$0xff]
        %v614 = vld [vmem:[#allocation5 + $0x678] sm:$0xff]
        %v615 = vld [vmem:[#allocation5 + $0x680] sm:$0xff]
        %v616 = vld [vmem:[#allocation5 + $0x688] sm:$0xff]
        %v617 = vld [vmem:[#allocation5 + $0x690] sm:$0xff]
        %v618 = vld [vmem:[#allocation5 + $0x698] sm:$0xff]
        %v619 = vld [vmem:[#allocation5 + $0x6a0] sm:$0xff]
        %v620 = vld [vmem:[#allocation5 + $0x6a8] sm:$0xff]
        %v621 = vld [vmem:[#allocation5 + $0x6b0] sm:$0xff]
        %v622 = vld [vmem:[#allocation5 + $0x6b8] sm:$0xff]
        %v623 = vld [vmem:[#allocation5 + $0x6c0] sm:$0xff]
        %v624 = vld [vmem:[#allocation5 + $0x6c8] sm:$0xff]
        %v625 = vld [vmem:[#allocation5 + $0x6d0] sm:$0xff]
        %v626 = vld [vmem:[#allocation5 + $0x6d8] sm:$0xff]
        %v627 = vld [vmem:[#allocation5 + $0x6e0] sm:$0xff]
        %v628 = vld [vmem:[#allocation5 + $0x6e8] sm:$0xff]
        %v629 = vld [vmem:[#allocation5 + $0x6f0] sm:$0xff]
        %v630 = vld [vmem:[#allocation5 + $0x6f8] sm:$0xff]
        %v631 = vld [vmem:[#allocation5 + $0x700] sm:$0xff]
        %v632 = vld [vmem:[#allocation5 + $0x708] sm:$0xff]
        %v633 = vld [vmem:[#allocation5 + $0x710] sm:$0xff]
        %v634 = vld [vmem:[#allocation5 + $0x718] sm:$0xff]
        %v635 = vld [vmem:[#allocation5 + $0x720] sm:$0xff]
        %v636 = vld [vmem:[#allocation5 + $0x728] sm:$0xff]
        %v637 = vld [vmem:[#allocation5 + $0x730] sm:$0xff]
        %v638 = vld [vmem:[#allocation5 + $0x738] sm:$0xff]
        %v639 = vld [vmem:[#allocation5 + $0x740] sm:$0xff]
        %v640 = vld [vmem:[#allocation5 + $0x748] sm:$0xff]
        %v641 = vld [vmem:[#allocation5 + $0x750] sm:$0xff]
        %v642 = vld [vmem:[#allocation5 + $0x758] sm:$0xff]
        %v643 = vld [vmem:[#allocation5 + $0x760] sm:$0xff]
        %v644 = vld [vmem:[#allocation5 + $0x768] sm:$0xff]
        %v645 = vld [vmem:[#allocation5 + $0x770] sm:$0xff]
        %v646 = vld [vmem:[#allocation5 + $0x778] sm:$0xff]
        %v647 = vld [vmem:[#allocation5 + $0x780] sm:$0xff]
        %v648 = vld [vmem:[#allocation5 + $0x788] sm:$0xff]
        %v649 = vld [vmem:[#allocation5 + $0x790] sm:$0xff]
        %v650 = vld [vmem:[#allocation5 + $0x798] sm:$0xff]
        %v651 = vld [vmem:[#allocation5 + $0x7a0] sm:$0xff]
        %v652 = vld [vmem:[#allocation5 + $0x7a8] sm:$0xff]
        %v653 = vld [vmem:[#allocation5 + $0x7b0] sm:$0xff]
        %v654 = vld [vmem:[#allocation5 + $0x7b8] sm:$0xff]
        %v655 = vld [vmem:[#allocation5 + $0x7c0] sm:$0xff]
        %v656 = vld [vmem:[#allocation5 + $0x7c8] sm:$0xff]
        %v657 = vld [vmem:[#allocation5 + $0x7d0] sm:$0xff]
        %v658 = vld [vmem:[#allocation5 + $0x7d8] sm:$0xff]
        %v659 = vld [vmem:[#allocation5 + $0x7e0] sm:$0xff]
        %v660 = vld [vmem:[#allocation5 + $0x7e8] sm:$0xff]
        %v661 = vld [vmem:[#allocation5 + $0x7f0] sm:$0xff]
        %v662 = vld [vmem:[#allocation5 + $0x7f8] sm:$0xff]
        %663 = vmatpush.msra.mxu0 %v422
        %664 = vmatpush.msra.mxu0 %v421
        %665 = vmatpush.msra.mxu0 %v420
        %666 = vmatpush.msra.mxu0 %v419
        %667 = vmatpush.msra.mxu0 %v418
        %668 = vmatpush.msra.mxu0 %v417
        %669 = vmatpush.msra.mxu0 %v416
        %670 = vmatpush.msra.mxu0 %v415
        %671 = vmatpush.msra.mxu0 %v414
        %672 = vmatpush.msra.mxu0 %v413
        %673 = vmatpush.msra.mxu0 %v412
        %674 = vmatpush.msra.mxu0 %v411
        %675 = vmatpush.msra.mxu0 %v410
        %676 = vmatpush.msra.mxu0 %v409
        %677 = vmatpush.msra.mxu0 %v408
        %678 = vmatpush.msra.mxu0 %v407
        %679 = vmatmul.f32.gmra.mxu0 %v343
        %v680 = vpop.f32.mrf.mxu0
        %v681 = vadd.f32 0.0, %v680
        %682 = vmatmul.f32.gmra.mxu0 %v359
        %v683 = vpop.f32.mrf.mxu0
        %v684 = vadd.f32 0.0, %v683
        %685 = vdwg.mxu0
        %686 = vmatpush.msra.mxu0 %v438
        %687 = vmatpush.msra.mxu0 %v437
        %688 = vmatpush.msra.mxu0 %v436
        %689 = vmatpush.msra.mxu0 %v435
        %690 = vmatpush.msra.mxu0 %v434
        %691 = vmatpush.msra.mxu0 %v433
        %692 = vmatpush.msra.mxu0 %v432
        %693 = vmatpush.msra.mxu0 %v431
        %694 = vmatpush.msra.mxu0 %v430
        %695 = vmatpush.msra.mxu0 %v429
        %696 = vmatpush.msra.mxu0 %v428
        %697 = vmatpush.msra.mxu0 %v427
        %698 = vmatpush.msra.mxu0 %v426
        %699 = vmatpush.msra.mxu0 %v425
        %700 = vmatpush.msra.mxu0 %v424
        %701 = vmatpush.msra.mxu0 %v423
        %702 = vmatmul.f32.gmra.mxu0 %v344
        %v703 = vpop.f32.mrf.mxu0
        %v704 = vadd.f32 %v681, %v703
        %705 = vmatmul.f32.gmra.mxu0 %v360
        %v706 = vpop.f32.mrf.mxu0
        %v707 = vadd.f32 %v684, %v706
        %708 = vdwg.mxu0
        %709 = vmatpush.msra.mxu0 %v454
        %710 = vmatpush.msra.mxu0 %v453
        %711 = vmatpush.msra.mxu0 %v452
        %712 = vmatpush.msra.mxu0 %v451
        %713 = vmatpush.msra.mxu0 %v450
        %714 = vmatpush.msra.mxu0 %v449
        %715 = vmatpush.msra.mxu0 %v448
        %716 = vmatpush.msra.mxu0 %v447
        %717 = vmatpush.msra.mxu0 %v446
        %718 = vmatpush.msra.mxu0 %v445
        %719 = vmatpush.msra.mxu0 %v444
        %720 = vmatpush.msra.mxu0 %v443
        %721 = vmatpush.msra.mxu0 %v442
        %722 = vmatpush.msra.mxu0 %v441
        %723 = vmatpush.msra.mxu0 %v440
        %724 = vmatpush.msra.mxu0 %v439
        %725 = vmatmul.f32.gmra.mxu0 %v345
        %v726 = vpop.f32.mrf.mxu0
        %v727 = vadd.f32 %v704, %v726
        %728 = vmatmul.f32.gmra.mxu0 %v361
        %v729 = vpop.f32.mrf.mxu0
        %v730 = vadd.f32 %v707, %v729
        %731 = vdwg.mxu0
        %732 = vmatpush.msra.mxu0 %v470
        %733 = vmatpush.msra.mxu0 %v469
        %734 = vmatpush.msra.mxu0 %v468
        %735 = vmatpush.msra.mxu0 %v467
        %736 = vmatpush.msra.mxu0 %v466
        %737 = vmatpush.msra.mxu0 %v465
        %738 = vmatpush.msra.mxu0 %v464
        %739 = vmatpush.msra.mxu0 %v463
        %740 = vmatpush.msra.mxu0 %v462
        %741 = vmatpush.msra.mxu0 %v461
        %742 = vmatpush.msra.mxu0 %v460
        %743 = vmatpush.msra.mxu0 %v459
        %744 = vmatpush.msra.mxu0 %v458
        %745 = vmatpush.msra.mxu0 %v457
        %746 = vmatpush.msra.mxu0 %v456
        %747 = vmatpush.msra.mxu0 %v455
        %748 = vmatmul.f32.gmra.mxu0 %v346
        %v749 = vpop.f32.mrf.mxu0
        %v750 = vadd.f32 %v727, %v749
        %751 = vmatmul.f32.gmra.mxu0 %v362
        %v752 = vpop.f32.mrf.mxu0
        %v753 = vadd.f32 %v730, %v752
        %754 = vdwg.mxu0
        %755 = vmatpush.msra.mxu0 %v486
        %756 = vmatpush.msra.mxu0 %v485
        %757 = vmatpush.msra.mxu0 %v484
        %758 = vmatpush.msra.mxu0 %v483
        %759 = vmatpush.msra.mxu0 %v482
        %760 = vmatpush.msra.mxu0 %v481
        %761 = vmatpush.msra.mxu0 %v480
        %762 = vmatpush.msra.mxu0 %v479
        %763 = vmatpush.msra.mxu0 %v478
        %764 = vmatpush.msra.mxu0 %v477
        %765 = vmatpush.msra.mxu0 %v476
        %766 = vmatpush.msra.mxu0 %v475
        %767 = vmatpush.msra.mxu0 %v474
        %768 = vmatpush.msra.mxu0 %v473
        %769 = vmatpush.msra.mxu0 %v472
        %770 = vmatpush.msra.mxu0 %v471
        %771 = vmatmul.f32.gmra.mxu0 %v347
        %v772 = vpop.f32.mrf.mxu0
        %v773 = vadd.f32 %v750, %v772
        %774 = vmatmul.f32.gmra.mxu0 %v363
        %v775 = vpop.f32.mrf.mxu0
        %v776 = vadd.f32 %v753, %v775
        %777 = vdwg.mxu0
        %778 = vmatpush.msra.mxu0 %v502
        %779 = vmatpush.msra.mxu0 %v501
        %780 = vmatpush.msra.mxu0 %v500
        %781 = vmatpush.msra.mxu0 %v499
        %782 = vmatpush.msra.mxu0 %v498
        %783 = vmatpush.msra.mxu0 %v497
        %784 = vmatpush.msra.mxu0 %v496
        %785 = vmatpush.msra.mxu0 %v495
        %786 = vmatpush.msra.mxu0 %v494
        %787 = vmatpush.msra.mxu0 %v493
        %788 = vmatpush.msra.mxu0 %v492
        %789 = vmatpush.msra.mxu0 %v491
        %790 = vmatpush.msra.mxu0 %v490
        %791 = vmatpush.msra.mxu0 %v489
        %792 = vmatpush.msra.mxu0 %v488
        %793 = vmatpush.msra.mxu0 %v487
        %794 = vmatmul.f32.gmra.mxu0 %v348
        %v795 = vpop.f32.mrf.mxu0
        %v796 = vadd.f32 %v773, %v795
        %797 = vmatmul.f32.gmra.mxu0 %v364
        %v798 = vpop.f32.mrf.mxu0
        %v799 = vadd.f32 %v776, %v798
        %800 = vdwg.mxu0
        %801 = vmatpush.msra.mxu0 %v518
        %802 = vmatpush.msra.mxu0 %v517
        %803 = vmatpush.msra.mxu0 %v516
        %804 = vmatpush.msra.mxu0 %v515
        %805 = vmatpush.msra.mxu0 %v514
        %806 = vmatpush.msra.mxu0 %v513
        %807 = vmatpush.msra.mxu0 %v512
        %808 = vmatpush.msra.mxu0 %v511
        %809 = vmatpush.msra.mxu0 %v510
        %810 = vmatpush.msra.mxu0 %v509
        %811 = vmatpush.msra.mxu0 %v508
        %812 = vmatpush.msra.mxu0 %v507
        %813 = vmatpush.msra.mxu0 %v506
        %814 = vmatpush.msra.mxu0 %v505
        %815 = vmatpush.msra.mxu0 %v504
        %816 = vmatpush.msra.mxu0 %v503
        %817 = vmatmul.f32.gmra.mxu0 %v349
        %v818 = vpop.f32.mrf.mxu0
        %v819 = vadd.f32 %v796, %v818
        %820 = vmatmul.f32.gmra.mxu0 %v365
        %v821 = vpop.f32.mrf.mxu0
        %v822 = vadd.f32 %v799, %v821
        %823 = vdwg.mxu0
        %824 = vmatpush.msra.mxu0 %v534
        %825 = vmatpush.msra.mxu0 %v533
        %826 = vmatpush.msra.mxu0 %v532
        %827 = vmatpush.msra.mxu0 %v531
        %828 = vmatpush.msra.mxu0 %v530
        %829 = vmatpush.msra.mxu0 %v529
        %830 = vmatpush.msra.mxu0 %v528
        %831 = vmatpush.msra.mxu0 %v527
        %832 = vmatpush.msra.mxu0 %v526
        %833 = vmatpush.msra.mxu0 %v525
        %834 = vmatpush.msra.mxu0 %v524
        %835 = vmatpush.msra.mxu0 %v523
        %836 = vmatpush.msra.mxu0 %v522
        %837 = vmatpush.msra.mxu0 %v521
        %838 = vmatpush.msra.mxu0 %v520
        %839 = vmatpush.msra.mxu0 %v519
        %840 = vmatmul.f32.gmra.mxu0 %v350
        %v841 = vpop.f32.mrf.mxu0
        %v842 = vadd.f32 %v819, %v841
        %843 = vmatmul.f32.gmra.mxu0 %v366
        %v844 = vpop.f32.mrf.mxu0
        %v845 = vadd.f32 %v822, %v844
        %846 = vdwg.mxu0
        %847 = vmatpush.msra.mxu0 %v550
        %848 = vmatpush.msra.mxu0 %v549
        %849 = vmatpush.msra.mxu0 %v548
        %850 = vmatpush.msra.mxu0 %v547
        %851 = vmatpush.msra.mxu0 %v546
        %852 = vmatpush.msra.mxu0 %v545
        %853 = vmatpush.msra.mxu0 %v544
        %854 = vmatpush.msra.mxu0 %v543
        %855 = vmatpush.msra.mxu0 %v542
        %856 = vmatpush.msra.mxu0 %v541
        %857 = vmatpush.msra.mxu0 %v540
        %858 = vmatpush.msra.mxu0 %v539
        %859 = vmatpush.msra.mxu0 %v538
        %860 = vmatpush.msra.mxu0 %v537
        %861 = vmatpush.msra.mxu0 %v536
        %862 = vmatpush.msra.mxu0 %v535
        %863 = vmatmul.f32.gmra.mxu0 %v351
        %v864 = vpop.f32.mrf.mxu0
        %v865 = vadd.f32 %v842, %v864
        %866 = vmatmul.f32.gmra.mxu0 %v367
        %v867 = vpop.f32.mrf.mxu0
        %v868 = vadd.f32 %v845, %v867
        %869 = vdwg.mxu0
        %870 = vmatpush.msra.mxu0 %v566
        %871 = vmatpush.msra.mxu0 %v565
        %872 = vmatpush.msra.mxu0 %v564
        %873 = vmatpush.msra.mxu0 %v563
        %874 = vmatpush.msra.mxu0 %v562
        %875 = vmatpush.msra.mxu0 %v561
        %876 = vmatpush.msra.mxu0 %v560
        %877 = vmatpush.msra.mxu0 %v559
        %878 = vmatpush.msra.mxu0 %v558
        %879 = vmatpush.msra.mxu0 %v557
        %880 = vmatpush.msra.mxu0 %v556
        %881 = vmatpush.msra.mxu0 %v555
        %882 = vmatpush.msra.mxu0 %v554
        %883 = vmatpush.msra.mxu0 %v553
        %884 = vmatpush.msra.mxu0 %v552
        %885 = vmatpush.msra.mxu0 %v551
        %886 = vmatmul.f32.gmra.mxu0 %v352
        %v887 = vpop.f32.mrf.mxu0
        %v888 = vadd.f32 %v865, %v887
        %889 = vmatmul.f32.gmra.mxu0 %v368
        %v890 = vpop.f32.mrf.mxu0
        %v891 = vadd.f32 %v868, %v890
        %892 = vdwg.mxu0
        %893 = vmatpush.msra.mxu0 %v582
        %894 = vmatpush.msra.mxu0 %v581
        %895 = vmatpush.msra.mxu0 %v580
        %896 = vmatpush.msra.mxu0 %v579
        %897 = vmatpush.msra.mxu0 %v578
        %898 = vmatpush.msra.mxu0 %v577
        %899 = vmatpush.msra.mxu0 %v576
        %900 = vmatpush.msra.mxu0 %v575
        %901 = vmatpush.msra.mxu0 %v574
        %902 = vmatpush.msra.mxu0 %v573
        %903 = vmatpush.msra.mxu0 %v572
        %904 = vmatpush.msra.mxu0 %v571
        %905 = vmatpush.msra.mxu0 %v570
        %906 = vmatpush.msra.mxu0 %v569
        %907 = vmatpush.msra.mxu0 %v568
        %908 = vmatpush.msra.mxu0 %v567
        %909 = vmatmul.f32.gmra.mxu0 %v353
        %v910 = vpop.f32.mrf.mxu0
        %v911 = vadd.f32 %v888, %v910
        %912 = vmatmul.f32.gmra.mxu0 %v369
        %v913 = vpop.f32.mrf.mxu0
        %v914 = vadd.f32 %v891, %v913
        %915 = vdwg.mxu0
        %916 = vmatpush.msra.mxu0 %v598
        %917 = vmatpush.msra.mxu0 %v597
        %918 = vmatpush.msra.mxu0 %v596
        %919 = vmatpush.msra.mxu0 %v595
        %920 = vmatpush.msra.mxu0 %v594
        %921 = vmatpush.msra.mxu0 %v593
        %922 = vmatpush.msra.mxu0 %v592
        %923 = vmatpush.msra.mxu0 %v591
        %924 = vmatpush.msra.mxu0 %v590
        %925 = vmatpush.msra.mxu0 %v589
        %926 = vmatpush.msra.mxu0 %v588
        %927 = vmatpush.msra.mxu0 %v587
        %928 = vmatpush.msra.mxu0 %v586
        %929 = vmatpush.msra.mxu0 %v585
        %930 = vmatpush.msra.mxu0 %v584
        %931 = vmatpush.msra.mxu0 %v583
        %932 = vmatmul.f32.gmra.mxu0 %v354
        %v933 = vpop.f32.mrf.mxu0
        %v934 = vadd.f32 %v911, %v933
        %935 = vmatmul.f32.gmra.mxu0 %v370
        %v936 = vpop.f32.mrf.mxu0
        %v937 = vadd.f32 %v914, %v936
        %938 = vdwg.mxu0
        %939 = vmatpush.msra.mxu0 %v614
        %940 = vmatpush.msra.mxu0 %v613
        %941 = vmatpush.msra.mxu0 %v612
        %942 = vmatpush.msra.mxu0 %v611
        %943 = vmatpush.msra.mxu0 %v610
        %944 = vmatpush.msra.mxu0 %v609
        %945 = vmatpush.msra.mxu0 %v608
        %946 = vmatpush.msra.mxu0 %v607
        %947 = vmatpush.msra.mxu0 %v606
        %948 = vmatpush.msra.mxu0 %v605
        %949 = vmatpush.msra.mxu0 %v604
        %950 = vmatpush.msra.mxu0 %v603
        %951 = vmatpush.msra.mxu0 %v602
        %952 = vmatpush.msra.mxu0 %v601
        %953 = vmatpush.msra.mxu0 %v600
        %954 = vmatpush.msra.mxu0 %v599
        %955 = vmatmul.f32.gmra.mxu0 %v355
        %v956 = vpop.f32.mrf.mxu0
        %v957 = vadd.f32 %v934, %v956
        %958 = vmatmul.f32.gmra.mxu0 %v371
        %v959 = vpop.f32.mrf.mxu0
        %v960 = vadd.f32 %v937, %v959
        %961 = vdwg.mxu0
        %962 = vmatpush.msra.mxu0 %v630
        %963 = vmatpush.msra.mxu0 %v629
        %964 = vmatpush.msra.mxu0 %v628
        %965 = vmatpush.msra.mxu0 %v627
        %966 = vmatpush.msra.mxu0 %v626
        %967 = vmatpush.msra.mxu0 %v625
        %968 = vmatpush.msra.mxu0 %v624
        %969 = vmatpush.msra.mxu0 %v623
        %970 = vmatpush.msra.mxu0 %v622
        %971 = vmatpush.msra.mxu0 %v621
        %972 = vmatpush.msra.mxu0 %v620
        %973 = vmatpush.msra.mxu0 %v619
        %974 = vmatpush.msra.mxu0 %v618
        %975 = vmatpush.msra.mxu0 %v617
        %976 = vmatpush.msra.mxu0 %v616
        %977 = vmatpush.msra.mxu0 %v615
        %978 = vmatmul.f32.gmra.mxu0 %v356
        %v979 = vpop.f32.mrf.mxu0
        %v980 = vadd.f32 %v957, %v979
        %981 = vmatmul.f32.gmra.mxu0 %v372
        %v982 = vpop.f32.mrf.mxu0
        %v983 = vadd.f32 %v960, %v982
        %984 = vdwg.mxu0
        %985 = vmatpush.msra.mxu0 %v646
        %986 = vmatpush.msra.mxu0 %v645
        %987 = vmatpush.msra.mxu0 %v644
        %988 = vmatpush.msra.mxu0 %v643
        %989 = vmatpush.msra.mxu0 %v642
        %990 = vmatpush.msra.mxu0 %v641
        %991 = vmatpush.msra.mxu0 %v640
        %992 = vmatpush.msra.mxu0 %v639
        %993 = vmatpush.msra.mxu0 %v638
        %994 = vmatpush.msra.mxu0 %v637
        %995 = vmatpush.msra.mxu0 %v636
        %996 = vmatpush.msra.mxu0 %v635
        %997 = vmatpush.msra.mxu0 %v634
        %998 = vmatpush.msra.mxu0 %v633
        %999 = vmatpush.msra.mxu0 %v632
        %1000 = vmatpush.msra.mxu0 %v631
        %1001 = vmatmul.f32.gmra.mxu0 %v357
        %v1002 = vpop.f32.mrf.mxu0
        %v1003 = vadd.f32 %v980, %v1002
        %1004 = vmatmul.f32.gmra.mxu0 %v373
        %v1005 = vpop.f32.mrf.mxu0
        %v1006 = vadd.f32 %v983, %v1005
        %1007 = vdwg.mxu0
        %1008 = vmatpush.msra.mxu0 %v662
        %1009 = vmatpush.msra.mxu0 %v661
        %1010 = vmatpush.msra.mxu0 %v660
        %1011 = vmatpush.msra.mxu0 %v659
        %1012 = vmatpush.msra.mxu0 %v658
        %1013 = vmatpush.msra.mxu0 %v657
        %1014 = vmatpush.msra.mxu0 %v656
        %1015 = vmatpush.msra.mxu0 %v655
        %1016 = vmatpush.msra.mxu0 %v654
        %1017 = vmatpush.msra.mxu0 %v653
        %1018 = vmatpush.msra.mxu0 %v652
        %1019 = vmatpush.msra.mxu0 %v651
        %1020 = vmatpush.msra.mxu0 %v650
        %1021 = vmatpush.msra.mxu0 %v649
        %1022 = vmatpush.msra.mxu0 %v648
        %1023 = vmatpush.msra.mxu0 %v647
        %1024 = vmatmul.f32.gmra.mxu0 %v358
        %v1025 = vpop.f32.mrf.mxu0
        %v1026 = vadd.f32 %v1003, %v1025
        %1027 = vmatmul.f32.gmra.mxu0 %v374
        %v1028 = vpop.f32.mrf.mxu0
        %v1029 = vadd.f32 %v1006, %v1028
        %1030 = vdwg.mxu0
        %1031 = vst [vmem:[%s212] sm:$0xff] %v1026
        %1032 = vst [vmem:[%s212 + $0x8] sm:$0xff] %v1029
        %s1033 = sand.u32 %s80, 1
        %s1034 = scalar_lea.sflag [#allocation4], %s1033
        %s1035 = sand.u32 %s80, 1
        %s1036 = smul.addr %s1035, 16
        %s1037 = scalar_lea.vmem [#allocation7], %s1036
        %s1038 = sand.u32 %s106, 1
        %s1039 = scalar_lea.sflag [#allocation9], %s1038
        %s1040 = sand.u32 %s106, 1
        %s1041 = smul.addr %s1040, 256
        %s1042 = scalar_lea.vmem [#allocation8], %s1041
        // Predicated region
        $region37: #{tpu_custom_call.1} parent=27 // pred_check
          %p1043 = pneg %p90
        $region38: #{tpu_custom_call.1} parent=27 // pred_check_branch
          %1045 = sbr.rel (%p1043) target = $region40
        $region39: #{tpu_custom_call.1} parent=27 // pred_region
          %s1046 = smul.u32 2, %s25
          %1048 = vsyncadd %s1034, 0
          %s1049 = smul.addr %s1046, 8
          %s1050 = scalar_lea.hbm %s2, %s1049
          %s1051 = sshll.u32 %s1037, 4
          %s1052 = int_to_ptr.vmem [resolvable:$true] %s1051
          %s1053 = sshll.u32 %s1050, 4
          %s1054 = int_to_ptr.hbm [resolvable:$true] %s1053
          %1059 = dma.vmem_to_hbm [thread:$0]  %s1052, 256, %s1054, %s1034, 128, 128, 8
        $region40: #{tpu_custom_call.1} parent=27 // pred_fallthru
          _
        // Predicated region
        $region41: #{tpu_custom_call.1} parent=27 // pred_check
          %p1060 = pneg %p116
        $region42: #{tpu_custom_call.1} parent=27 // pred_check_branch
          %1062 = sbr.rel (%p1060) target = $region44
        $region43: #{tpu_custom_call.1} parent=27 // pred_region
          %s1063 = smul.u32 2, %s25
          %1065 = vsyncadd %s1039, 0
          %s1066 = smul.addr %s1063, 16
          %s1067 = smul.addr %s1066, 8
          %s1068 = scalar_lea.hbm %s3, %s1067
          %s1069 = sshll.u32 %s1042, 4
          %s1070 = int_to_ptr.vmem [resolvable:$true] %s1069
          %s1071 = sshll.u32 %s1068, 4
          %s1072 = int_to_ptr.hbm [resolvable:$true] %s1071
          %1077 = dma.vmem_to_hbm [thread:$0]  %s1070, 4096, %s1072, %s1039, 2048, 2048, 128
        $region44: #{tpu_custom_call.1} parent=27 // pred_fallthru
          _
      $region28: #{tpu_custom_call.1} parent=5 // pred_fallthru
        _
      %p1078 = scmp.le.s32.totalorder 2, %s20
      // Predicated region
      $region45: #{tpu_custom_call.1} parent=5 // pred_check
        %p1079 = pneg %p1078
      $region46: #{tpu_custom_call.1} parent=5 // pred_check_branch
        %1081 = sbr.rel (%p1079) target = $region48
      $region47: #{tpu_custom_call.1} parent=5 // pred_region
        %s1082 = ssub.s32 %s20, 2
        // Predicated region
        $region49: #{tpu_custom_call.1} parent=47 // pred_check
          %p1083 = pneg %p96
        $region50: #{tpu_custom_call.1} parent=47 // pred_check_branch
          %1085 = sbr.rel (%p1083) target = $region52
        $region51: #{tpu_custom_call.1} parent=47 // pred_region
          %s1086 = sand.u32 %s81, 1
          %s1087 = scalar_lea.sflag [#allocation4], %s1086
          %s1088 = sand.u32 %s81, 1
          %s1089 = smul.addr %s1088, 16
          %s1090 = scalar_lea.vmem [#allocation7], %s1089
          %1092 = dma.done %s1087, 256
        $region52: #{tpu_custom_call.1} parent=47 // pred_fallthru
          _
        // Predicated region
        $region53: #{tpu_custom_call.1} parent=47 // pred_check
          %p1093 = pneg %p122
        $region54: #{tpu_custom_call.1} parent=47 // pred_check_branch
          %1095 = sbr.rel (%p1093) target = $region56
        $region55: #{tpu_custom_call.1} parent=47 // pred_region
          %s1096 = sand.u32 %s107, 1
          %s1097 = scalar_lea.sflag [#allocation9], %s1096
          %s1098 = sand.u32 %s107, 1
          %s1099 = smul.addr %s1098, 256
          %s1100 = scalar_lea.vmem [#allocation8], %s1099
          %1102 = dma.done %s1097, 4096
        $region56: #{tpu_custom_call.1} parent=47 // pred_fallthru
          _
      $region48: #{tpu_custom_call.1} parent=5 // pred_fallthru
        _
    $region6: #{tpu_custom_call.1} parent=1 // loop_footer
      %s24 = sadd.s32 1, %s20
    $region7: #{tpu_custom_call.1} parent=1 // loop_footer_branch
      %19 = sbr.rel target = $region3
    $region8: #{tpu_custom_call.1} parent=1 // loop_exit
      _
    %1103 = vsyncpa [#allocation3], 1
    %s1104 = scalar_lea.sflag [#allocation3], 1
    %1105 = vsyncpa %s1104, 1
    %1106 = vsyncpa [#allocation6], 1
    %1107 = vsyncpa [#allocation4], 1
    %s1108 = scalar_lea.sflag [#allocation4], 1
    %1109 = vsyncpa %s1108, 1
    %1110 = vsyncpa [#allocation9], 1
    %s1111 = scalar_lea.sflag [#allocation9], 1
    %1112 = vsyncpa %s1111, 1

</llo_original>
